<compile_context>
chip_gen: v5e
topology: v5e:2x2
jax: 0.10.0
libtpu: 0.0.40
codegen_flags: <defaults>
</compile_context>

<pallas_src>
import jax
import jax.numpy as jnp
from jax.experimental import pallas as pl
from jax.experimental.pallas import tpu as pltpu


def _copy_reshape_kernel(x_ref, o_ref):
    # Pure copy; input and output blocks differ only in the position of
    # size-1 axes, so the reshape is a layout-free relabel.
    o_ref[...] = x_ref[...].reshape(o_ref.shape)


def _lane_dense_spatial(P, Q):
    """Pick a contiguous re-factorization of the spatial payload whose last
    dim is a multiple of 128 (lane-dense) when possible."""
    S = P * Q
    if Q % 128 == 0:
        return P, Q
    if S % 128 == 0:
        return S // 128, 128
    return P, Q


def _pick_channel_tile(n, plane_bytes, target_bytes):
    """Largest divisor of n whose fused block stays under target_bytes."""
    max_t = max(1, target_bytes // max(1, plane_bytes))
    best = 1
    for d in range(1, n + 1):
        if n % d == 0 and d <= max_t:
            best = d
    return best


def _axis12_transpose(xv, *, tiled_axis, target_block_bytes=4 * 1024 * 1024):
    """(B, M, N, P, Q) -> (B, N, M, P, Q) as a Pallas copy kernel.

    `tiled_axis` (1 or 2) selects which of the two swapped axes is fused into
    each block (the channel-like, large one); the other (the sub-band axis,
    extent 4) is walked by the grid, so the in-kernel reshape only moves
    size-1 axes and no in-VMEM transpose is needed.
    """
    B, M, N, P, Q = xv.shape
    itemsize = jnp.dtype(xv.dtype).itemsize
    # Padded VMEM footprint of one (P, Q) plane (sublane -> 8, lane -> 128).
    plane_bytes = (-(-P // 8) * 8) * (-(-Q // 128) * 128) * itemsize

    if tiled_axis == 1:
        walk, fuse = N, M
    else:
        walk, fuse = M, N
    ft = _pick_channel_tile(fuse, plane_bytes, target_block_bytes)
    n_ft = fuse // ft

    if tiled_axis == 1:
        in_block = (1, ft, 1, P, Q)
        out_block = (1, 1, ft, P, Q)
        in_map = lambda w, b, f: (b, f, w, 0, 0)
        out_map = lambda w, b, f: (b, w, f, 0, 0)
    else:
        in_block = (1, 1, ft, P, Q)
        out_block = (1, ft, 1, P, Q)
        in_map = lambda w, b, f: (b, w, f, 0, 0)
        out_map = lambda w, b, f: (b, f, w, 0, 0)

    return pl.pallas_call(
        _copy_reshape_kernel,
        out_shape=jax.ShapeDtypeStruct((B, N, M, P, Q), xv.dtype),
        grid=(walk, B, n_ft),
        in_specs=[pl.BlockSpec(in_block, in_map)],
        out_specs=pl.BlockSpec(out_block, out_map),
        compiler_params=pltpu.CompilerParams(
            dimension_semantics=("parallel", "parallel", "parallel"),
            vmem_limit_bytes=32 * 1024 * 1024,
        ),
    )(xv)


def haar_wavelet(x, in_channels, rev=False):
    B, Cin, H, W = x.shape
    C = in_channels

    if not rev:
        assert Cin == C and H % 2 == 0 and W % 2 == 0
        Hh, Wh = H // 2, W // 2
        P, Q = _lane_dense_spatial(Hh, Wh)
        # Free contiguous view (matches torch .reshape on contiguous NCHW).
        xv = x.reshape(B, C, 4, P, Q)
        out5 = _axis12_transpose(xv, tiled_axis=1)      # (B, 4, C, P, Q)
        return out5.reshape(B, 4 * C, Hh, Wh)
    else:
        assert Cin == 4 * C
        P, Q = _lane_dense_spatial(H, W)
        xv = x.reshape(B, 4, C, P, Q)
        out5 = _axis12_transpose(xv, tiled_axis=2)      # (B, C, 4, P, Q)
        return out5.reshape(B, C, 2 * H, 2 * W)


# Pure-JAX reference mirroring the PyTorch forward exactly (for verification).
def haar_wavelet_ref(x, in_channels, rev=False):
    B, _, H, W = x.shape
    C = in_channels
    if not rev:
        out = x.reshape(B, C, 4, H // 2, W // 2)
        out = jnp.transpose(out, (0, 2, 1, 3, 4)).reshape(B, 4 * C, H // 2, W // 2)
    else:
        out = x.reshape(B, 4, C, H, W)
        out = jnp.transpose(out, (0, 2, 1, 3, 4)).reshape(B, C, 2 * H, 2 * W)
    return out


if __name__ == "__main__":
    key = jax.random.PRNGKey(0)

    # Case 1: spec shapes (non-lane-dense spatial path).
    B, C, H, W = 2, 4, 16, 16
    x = jax.random.normal(key, (B, C, H, W), dtype=jnp.float32)

    y = jax.block_until_ready(haar_wavelet(x, in_channels=C, rev=False))
    y_ref = haar_wavelet_ref(x, in_channels=C, rev=False)
    assert y.shape == (B, 4 * C, H // 2, W // 2)
    assert jnp.array_equal(y, y_ref)

    x_rt = jax.block_until_ready(haar_wavelet(y, in_channels=C, rev=True))
    assert x_rt.shape == (B, C, H, W)
    assert jnp.array_equal(x_rt, x)
    assert jnp.array_equal(x_rt, haar_wavelet_ref(y, in_channels=C, rev=True))

    # Case 2: exercises the lane-dense (S % 128 == 0) spatial flattening path.
    B2, C2, H2, W2 = 1, 8, 32, 32
    x2 = jax.random.normal(jax.random.PRNGKey(1), (B2, C2, H2, W2), jnp.float32)
    y2 = jax.block_until_ready(haar_wavelet(x2, in_channels=C2, rev=False))
    assert jnp.array_equal(y2, haar_wavelet_ref(x2, in_channels=C2, rev=False))
    x2_rt = jax.block_until_ready(haar_wavelet(y2, in_channels=C2, rev=True))
    assert jnp.array_equal(x2_rt, x2)

    print("KERNEL_OK")
</pallas_src>

<mosaic_0001>
module attributes {stable_mosaic.version = 11 : i64} {
  func.func @_copy_reshape_kernel(%arg0: i32, %arg1: i32, %arg2: i32, %arg3: memref<1x4x1x8x8xf32, #tpu.memory_space<vmem>>, %arg4: memref<1x1x4x8x8xf32, #tpu.memory_space<vmem>>) attributes {dimension_semantics = [#tpu.dimension_semantics<parallel>, #tpu.dimension_semantics<parallel>, #tpu.dimension_semantics<parallel>], iteration_bounds = array<i64: 4, 2, 1>, scalar_prefetch = 0 : i64, scratch_operands = 0 : i64, tpu.core_type = #tpu.core_type<tc>, window_params = [{transform_indices = @transform_0, window_bounds = array<i64: 1, 4, 1, 8, 8>}, {transform_indices = @transform_1, window_bounds = array<i64: 1, 1, 4, 8, 8>}]} {
    %c0 = arith.constant 0 : index
    %c0_0 = arith.constant 0 : index
    %c0_1 = arith.constant 0 : index
    %c0_2 = arith.constant 0 : index
    %c0_3 = arith.constant 0 : index
    %0 = vector.load %arg3[%c0, %c0_0, %c0_1, %c0_2, %c0_3] : memref<1x4x1x8x8xf32, #tpu.memory_space<vmem>>, vector<1x4x1x8x8xf32>
    %1 = vector.shape_cast %0 : vector<1x4x1x8x8xf32> to vector<1x1x4x8x8xf32>
    %c0_4 = arith.constant 0 : index
    %c0_5 = arith.constant 0 : index
    %c0_6 = arith.constant 0 : index
    %c0_7 = arith.constant 0 : index
    %c0_8 = arith.constant 0 : index
    %2 = vector.load %arg4[%c0_4, %c0_5, %c0_6, %c0_7, %c0_8] : memref<1x1x4x8x8xf32, #tpu.memory_space<vmem>>, vector<1x1x4x8x8xf32>
    tpu.vector_store %arg4[%c0_4, %c0_5, %c0_6, %c0_7, %c0_8], %1 {strides = array<i32>} : memref<1x1x4x8x8xf32, #tpu.memory_space<vmem>>, vector<1x1x4x8x8xf32>,
    return
  }
  func.func @transform_0(%arg0: i32, %arg1: i32, %arg2: i32) -> (i32, i32, i32, i32, i32) {
    %c0_i32 = arith.constant 0 : i32
    %c0_i32_0 = arith.constant 0 : i32
    %c0_i32_1 = arith.constant 0 : i32
    return %arg1, %arg2, %arg0, %c0_i32, %c0_i32_0 : i32, i32, i32, i32, i32
  }
  func.func @transform_1(%arg0: i32, %arg1: i32, %arg2: i32) -> (i32, i32, i32, i32, i32) {
    %c0_i32 = arith.constant 0 : i32
    %c0_i32_0 = arith.constant 0 : i32
    %c0_i32_1 = arith.constant 0 : i32
    return %arg1, %arg0, %arg2, %c0_i32, %c0_i32_0 : i32, i32, i32, i32, i32
  }
}

</mosaic_0001>

<llo_original>
// kernel: tpu_custom_call.1
$region0: #{tpu_custom_call.1}
  #allocation0 [shape = 'u32[]', space=smem, size = 0x4, offset = 0x4, fixed_abs, tag = 'smem constant byte address 0x4 - core index']
  #allocation1 [shape = 'u32[72,128]{1,0:T(1,128)}', space=vmem, size = 0x9000, scoped, tag = 'internal scratch']
  %s0 = inlined_call_operand.hbm [shape: f32[2,4,4,8,8], index: 0, kind: input, shape index: {}]
  %s1 = inlined_call_operand.hbm [shape: f32[2,4,4,8,8], index: 1, kind: output, shape index: {}]
  %s2 = sld [smem:[#allocation0]]
  $region41: #{tpu_custom_call.1} parent=0
    _
  %s4 = ssub.s32 1, %s2
  %s5 = scalar_select 0, %s4, %s2
  $region1: #{tpu_custom_call.1} parent=0
    #allocation2 [shape = 'u8[32768]{0}', space=vmem, size = 0x8000, scoped, tag = 'input window, operand 0']
    #allocation3 [shape = 's32[2]{0}', space=sflag, size = 0x8, scoped, tag = 'scoped memory for tpu_custom_call.1']
    #allocation4 [shape = 's32[2]{0}', space=sflag, size = 0x8, scoped, tag = 'scoped memory for tpu_custom_call.1']
    #allocation5 [shape = 'u8[32768]{0}', space=vmem, size = 0x8000, scoped, tag = 'output window, operand 0']
    %6 = vsyncpa [#allocation3], 0
    %s7 = scalar_lea.sflag [#allocation3], 1
    %8 = vsyncpa %s7, 0
    %9 = vsyncpa [#allocation4], 0
    %s10 = scalar_lea.sflag [#allocation4], 1
    %11 = vsyncpa %s10, 0
    loop: start=0, step=1, limit=10
    $region2: #{tpu_custom_call.1} parent=1 // loop_pre_header
      _
    $region3: #{tpu_custom_call.1} parent=1 // loop_header
      %s13 = sphi 0, %s17
      %p14 = scmp.ge.s32.totalorder %s13, 10
      %s20 = sphi 0, %s39
      %s21 = sphi 0, %s35
      %s22 = sphi 0, %s31
      %s23 = sphi 0, %s20
      %s24 = sphi 0, %s21
      %s25 = sphi 0, %s22
      %s26 = sphi 0, %s23
      %s27 = sphi 0, %s24
      %s28 = sphi 0, %s25
      %s46 = sphi 0, %s48
      %s49 = sphi 0, %s46
      %s50 = sphi 0, %s49
      %s66 = sphi 0, %s50
      %s76 = sphi 0, %s78
      %s79 = sphi 0, %s76
      %s80 = sphi 0, %s79
      %s96 = sphi 0, %s80
    $region4: #{tpu_custom_call.1} parent=1 // loop_header_branch
      %16 = sbr.rel (%p14) target = $region8
    $region5: #{tpu_custom_call.1} parent=1 // loop_body
      %s18 = ssub.s32 %s13, 1
      %s19 = ssub.s32 %s13, 2
      %s29 = sadd.s32 1, %s22
      %p30 = scmp.ge.s32.totalorder %s29, 1
      %s31 = scalar_select %p30, 0, %s29
      %s32 = sadd.s32 1, %s21
      %s33 = scalar_select %p30, %s32, %s21
      %p34 = scmp.ge.s32.totalorder %s33, 2
      %s35 = scalar_select %p34, 0, %s33
      %s36 = sadd.s32 1, %s20
      %s37 = scalar_select %p34, %s36, %s20
      %p38 = scmp.ge.s32.totalorder %s37, 4
      %s39 = scalar_select %p38, 0, %s37
      %s40 = ssub.s32 %s21, %s35
      %s41 = ssub.s32 %s22, %s31
      %s42 = sor.u32 %s40, %s41
      %s43 = ssub.s32 %s20, %s39
      %s44 = sor.u32 %s42, %s43
      %p45 = scmp.eq.s32.totalorder %s44, 0
      %s47 = sadd.s32 %s46, 1
      %s48 = scalar_select %p45, %s46, %s47
      %p51 = pneg %p45
      %p52 = scmp.eq.s32.totalorder %s13, 7
      %p53 = por %p51, %p52
      %p54 = scmp.ne.s32.totalorder %s46, %s49
      %p55 = scmp.eq.s32.totalorder %s13, 0
      %p56 = por %p54, %p55
      %p57 = scmp.ne.s32.totalorder %s46, %s49
      %p58 = scmp.eq.s32.totalorder %s18, 7
      %p59 = por %p57, %p58
      %p60 = scmp.ne.s32.totalorder %s49, %s50
      %p61 = scmp.eq.s32.totalorder %s18, 0
      %p62 = por %p60, %p61
      %p63 = scmp.ne.s32.totalorder %s49, %s50
      %p64 = scmp.eq.s32.totalorder %s19, 7
      %p65 = por %p63, %p64
      %p67 = scmp.ne.s32.totalorder %s50, %s66
      %p68 = scmp.eq.s32.totalorder %s19, 0
      %p69 = por %p67, %p68
      %s70 = ssub.s32 %s21, %s35
      %s71 = ssub.s32 %s20, %s39
      %s72 = sor.u32 %s70, %s71
      %s73 = ssub.s32 %s22, %s31
      %s74 = sor.u32 %s72, %s73
      %p75 = scmp.eq.s32.totalorder %s74, 0
      %s77 = sadd.s32 %s76, 1
      %s78 = scalar_select %p75, %s76, %s77
      %p81 = pneg %p75
      %p82 = scmp.eq.s32.totalorder %s13, 7
      %p83 = por %p81, %p82
      %p84 = scmp.ne.s32.totalorder %s76, %s79
      %p85 = scmp.eq.s32.totalorder %s13, 0
      %p86 = por %p84, %p85
      %p87 = scmp.ne.s32.totalorder %s76, %s79
      %p88 = scmp.eq.s32.totalorder %s18, 7
      %p89 = por %p87, %p88
      %p90 = scmp.ne.s32.totalorder %s79, %s80
      %p91 = scmp.eq.s32.totalorder %s18, 0
      %p92 = por %p90, %p91
      %p93 = scmp.ne.s32.totalorder %s79, %s80
      %p94 = scmp.eq.s32.totalorder %s19, 7
      %p95 = por %p93, %p94
      %p97 = scmp.ne.s32.totalorder %s80, %s96
      %p98 = scmp.eq.s32.totalorder %s19, 0
      %p99 = por %p97, %p98
      %p100 = scmp.le.s32.totalorder 1, %s13
      %p101 = scmp.lt.s32.totalorder %s13, 9
      %p102 = pnand %p100, %p101
      %p103 = pneg %p102
      // Predicated region
      $region9: #{tpu_custom_call.1} parent=5 // pred_check
        _
      $region10: #{tpu_custom_call.1} parent=5 // pred_check_branch
        %105 = sbr.rel (%p102) target = $region12
      $region11: #{tpu_custom_call.1} parent=5 // pred_region
        %s106 = ssub.s32 %s13, 1
      $region12: #{tpu_custom_call.1} parent=5 // pred_fallthru
        _
      %p107 = scmp.lt.s32.totalorder %s13, 8
      // Predicated region
      $region13: #{tpu_custom_call.1} parent=5 // pred_check
        %p108 = pneg %p107
      $region14: #{tpu_custom_call.1} parent=5 // pred_check_branch
        %110 = sbr.rel (%p108) target = $region16
      $region15: #{tpu_custom_call.1} parent=5 // pred_region
        // Predicated region
        $region17: #{tpu_custom_call.1} parent=15 // pred_check
          %p111 = pneg %p56
        $region18: #{tpu_custom_call.1} parent=15 // pred_check_branch
          %113 = sbr.rel (%p111) target = $region20
        $region19: #{tpu_custom_call.1} parent=15 // pred_region
          %s114 = sand.u32 %s46, 1
          %s115 = scalar_lea.sflag [#allocation3], %s114
          %s116 = sand.u32 %s46, 1
          %s117 = smul.addr %s116, 32
          %s118 = scalar_lea.vmem [#allocation2], %s117
          %s119 = smul.u32 4, %s22
          %121 = vsyncadd %s115, 0
          %s122 = smul.addr %s119, 4
          %s123 = sadd.s32 %s20, %s122
          %s124 = smul.addr %s21, 16
          %s125 = sadd.s32 %s123, %s124
          %s126 = smul.addr %s125, 8
          %s127 = scalar_lea.hbm %s0, %s126
          %s128 = sshll.u32 %s127, 4
          %s129 = int_to_ptr.hbm [resolvable:$true] %s128
          %s130 = sshll.u32 %s118, 4
          %s131 = int_to_ptr.vmem [resolvable:$true] %s130
          %136 = dma.hbm_to_vmem [thread:$0]  %s129, 512, %s131, %s115, 512, 128, 8
        $region20: #{tpu_custom_call.1} parent=15 // pred_fallthru
          _
      $region16: #{tpu_custom_call.1} parent=5 // pred_fallthru
        _
      %p137 = scmp.le.s32.totalorder 1, %s13
      %p138 = scmp.lt.s32.totalorder %s13, 9
      %p139 = pnand %p137, %p138
      %p140 = pneg %p139
      // Predicated region
      $region21: #{tpu_custom_call.1} parent=5 // pred_check
        _
      $region22: #{tpu_custom_call.1} parent=5 // pred_check_branch
        %142 = sbr.rel (%p139) target = $region24
      $region23: #{tpu_custom_call.1} parent=5 // pred_region
        %s143 = ssub.s32 %s13, 1
        %s144 = sand.u32 %s49, 1
        %s145 = scalar_lea.sflag [#allocation3], %s144
        %s146 = sand.u32 %s49, 1
        %s147 = smul.addr %s146, 32
        %s148 = scalar_lea.vmem [#allocation2], %s147
        // Predicated region
        $region25: #{tpu_custom_call.1} parent=23 // pred_check
          %p149 = pneg %p62
        $region26: #{tpu_custom_call.1} parent=23 // pred_check_branch
          %151 = sbr.rel (%p149) target = $region28
        $region27: #{tpu_custom_call.1} parent=23 // pred_region
          %153 = dma.done %s145, 512
        $region28: #{tpu_custom_call.1} parent=23 // pred_fallthru
          _
        %s154 = sand.u32 %s49, 1
        %s155 = scalar_lea.sflag [#allocation3], %s154
        %s156 = sand.u32 %s49, 1
        %s157 = smul.addr %s156, 32
        %s158 = scalar_lea.vmem [#allocation2], %s157
        %p159 = pneg %p62
        %p160 = pneg %p59
        %p161 = pneg %p92
        %p162 = pneg %p89
        %s163 = sand.u32 %s79, 1
        %s164 = scalar_lea.sflag [#allocation4], %s163
        %s165 = sand.u32 %s79, 1
        %s166 = smul.addr %s165, 32
        %s167 = scalar_lea.vmem [#allocation5], %s166
        %s168 = smul.u32 4, %s25
        %s169 = smul.u32 4, %s25
        %v170 = vld [vmem:[%s148] sm:$0xff]
        %v171 = vld [vmem:[%s148 + $0x8] sm:$0xff]
        %v172 = vld [vmem:[%s148 + $0x10] sm:$0xff]
        %v173 = vld [vmem:[%s148 + $0x18] sm:$0xff]
        %vm174 = vcmask 64512
        %175 = vst.msk [vmem:[%s167] sm:$0xff] %vm174, %v170
        %176 = vst.msk [vmem:[%s167 + $0x8] sm:$0xff] %vm174, %v171
        %177 = vst.msk [vmem:[%s167 + $0x10] sm:$0xff] %vm174, %v172
        %178 = vst.msk [vmem:[%s167 + $0x18] sm:$0xff] %vm174, %v173
        %s179 = sand.u32 %s79, 1
        %s180 = scalar_lea.sflag [#allocation4], %s179
        %s181 = sand.u32 %s79, 1
        %s182 = smul.addr %s181, 32
        %s183 = scalar_lea.vmem [#allocation5], %s182
        // Predicated region
        $region29: #{tpu_custom_call.1} parent=23 // pred_check
          %p184 = pneg %p89
        $region30: #{tpu_custom_call.1} parent=23 // pred_check_branch
          %186 = sbr.rel (%p184) target = $region32
        $region31: #{tpu_custom_call.1} parent=23 // pred_region
          %s187 = smul.u32 4, %s25
          %189 = vsyncadd %s180, 0
          %s190 = smul.addr %s23, 4
          %s191 = sadd.s32 %s187, %s190
          %s192 = smul.addr %s24, 16
          %s193 = sadd.s32 %s191, %s192
          %s194 = smul.addr %s193, 8
          %s195 = scalar_lea.hbm %s1, %s194
          %s196 = sshll.u32 %s183, 4
          %s197 = int_to_ptr.vmem [resolvable:$true] %s196
          %s198 = sshll.u32 %s195, 4
          %s199 = int_to_ptr.hbm [resolvable:$true] %s198
          %204 = dma.vmem_to_hbm [thread:$0]  %s197, 512, %s199, %s180, 128, 128, 8
        $region32: #{tpu_custom_call.1} parent=23 // pred_fallthru
          _
      $region24: #{tpu_custom_call.1} parent=5 // pred_fallthru
        _
      %p205 = scmp.le.s32.totalorder 2, %s13
      // Predicated region
      $region33: #{tpu_custom_call.1} parent=5 // pred_check
        %p206 = pneg %p205
      $region34: #{tpu_custom_call.1} parent=5 // pred_check_branch
        %208 = sbr.rel (%p206) target = $region36
      $region35: #{tpu_custom_call.1} parent=5 // pred_region
        %s209 = ssub.s32 %s13, 2
        // Predicated region
        $region37: #{tpu_custom_call.1} parent=35 // pred_check
          %p210 = pneg %p95
        $region38: #{tpu_custom_call.1} parent=35 // pred_check_branch
          %212 = sbr.rel (%p210) target = $region40
        $region39: #{tpu_custom_call.1} parent=35 // pred_region
          %s213 = sand.u32 %s80, 1
          %s214 = scalar_lea.sflag [#allocation4], %s213
          %s215 = sand.u32 %s80, 1
          %s216 = smul.addr %s215, 32
          %s217 = scalar_lea.vmem [#allocation5], %s216
          %219 = dma.done %s214, 512
        $region40: #{tpu_custom_call.1} parent=35 // pred_fallthru
          _
      $region36: #{tpu_custom_call.1} parent=5 // pred_fallthru
        _
    $region6: #{tpu_custom_call.1} parent=1 // loop_footer
      %s17 = sadd.s32 1, %s13
    $region7: #{tpu_custom_call.1} parent=1 // loop_footer_branch
      %12 = sbr.rel target = $region3
    $region8: #{tpu_custom_call.1} parent=1 // loop_exit
      _
    %220 = vsyncpa [#allocation3], 1
    %s221 = scalar_lea.sflag [#allocation3], 1
    %222 = vsyncpa %s221, 1
    %223 = vsyncpa [#allocation4], 1
    %s224 = scalar_lea.sflag [#allocation4], 1
    %225 = vsyncpa %s224, 1

</llo_original>
